<compile_context>
chip_gen: v7x
topology: tpu7x:2x2x1
jax: 0.10.0
libtpu: 0.0.40
codegen_flags: <defaults>
</compile_context>

<pallas_src>
import jax
import jax.numpy as jnp
from jax.experimental import pallas as pl
from jax.experimental.pallas import tpu as pltpu


def _softplus(x):
    # Numerically-stable softplus matching torch.nn.Softplus (beta=1).
    # TODO(synk): torch uses a hard threshold=20 cutoff; the stable formula
    # below agrees to f32 precision without the explicit branch.
    return jnp.maximum(x, 0.0) + jnp.log1p(jnp.exp(-jnp.abs(x)))


def hypanet_kernel(x_ref, w1_ref, b1_ref, w2_ref, b2_ref, w3_ref, b3_ref,
                   o_ref):
    # x_ref block: (1, in_nc, tile) -> (in_nc, tile); pixels in lanes.
    x = x_ref[0].astype(jnp.bfloat16)

    # conv1 (1x1, K=in_nc) on the MXU; bias + ReLU + bf16 cast fused so the
    # f32 (channel, tile) intermediate is never round-tripped through VMEM.
    h = jnp.dot(w1_ref[...], x, preferred_element_type=jnp.float32)
    h = jnp.maximum(h + b1_ref[...], 0.0).astype(jnp.bfloat16)

    # conv2 (1x1) + ReLU, same fused epilogue.
    h = jnp.dot(w2_ref[...], h, preferred_element_type=jnp.float32)
    h = jnp.maximum(h + b2_ref[...], 0.0).astype(jnp.bfloat16)

    # conv3 (1x1) + Softplus + 1e-6 (elementwise math kept in f32).
    h = jnp.dot(w3_ref[...], h, preferred_element_type=jnp.float32)
    o_ref[0] = (_softplus(h + b3_ref[...]) + 1e-6).astype(o_ref.dtype)


def _round_up(v, m):
    return (v + m - 1) // m * m


def hypanet_forward(x_nchw, params, *, tile_n=8192):
    """x_nchw: (B, in_nc, H, W) float32. Returns (B, out_nc, H, W) float32."""
    w1, b1, w2, b2, w3, b3 = params
    channel, in_nc = w1.shape
    out_nc = w3.shape[0]
    B, C_in, H, W = x_nchw.shape
    assert C_in == in_nc

    n_pix = H * W
    x_flat = x_nchw.reshape(B, in_nc, n_pix)      # no transpose needed

    # Lane alignment: only pad when H*W isn't a multiple of 128 (tiny edge
    # case); otherwise Pallas' boundary-block masking handles partial tiles
    # with no wrapper-side pad/slice HBM passes.
    pad = (-n_pix) % 128
    n_lane = n_pix + pad

    tile = _round_up(min(tile_n, n_lane), 128)
    n_tiles = pl.cdiv(n_lane, tile)
    # v7x megacore load balance: keep the total step count even when cheap.
    if (B * n_tiles) % 2 == 1 and n_lane >= 256:
        tile = _round_up(pl.cdiv(n_lane, n_tiles + 1), 128)
        n_tiles = pl.cdiv(n_lane, tile)

    if pad:
        x_flat = jnp.pad(x_flat, ((0, 0), (0, 0), (0, pad)))

    # Cast MXU weights to bf16 once in the wrapper; biases stay f32 and all
    # bias/ReLU/softplus math stays in f32 (no bf16 VPU/EUP on v5e).
    w1_bf = w1.astype(jnp.bfloat16)
    w2_bf = w2.astype(jnp.bfloat16)
    w3_bf = w3.astype(jnp.bfloat16)

    grid = (B, n_tiles)

    flops = 2 * B * n_pix * (in_nc * channel + channel * channel
                             + channel * out_nc)
    transcendentals = 2 * B * out_nc * n_pix            # exp + log1p
    bytes_accessed = (B * n_pix * (in_nc + out_nc) * 4
                      + (w1_bf.size + w2_bf.size + w3_bf.size) * 2
                      + (b1.size + b2.size + b3.size) * 4)

    out = pl.pallas_call(
        hypanet_kernel,
        out_shape=jax.ShapeDtypeStruct((B, out_nc, n_lane), jnp.float32),
        grid_spec=pltpu.PrefetchScalarGridSpec(
            num_scalar_prefetch=0,
            grid=grid,
            in_specs=[
                pl.BlockSpec((1, in_nc, tile), lambda b, j: (b, 0, j)),
                # Constant index maps -> weights DMA'd once, stay in VMEM.
                pl.BlockSpec(w1_bf.shape, lambda b, j: (0, 0)),
                pl.BlockSpec(b1.shape, lambda b, j: (0, 0)),
                pl.BlockSpec(w2_bf.shape, lambda b, j: (0, 0)),
                pl.BlockSpec(b2.shape, lambda b, j: (0, 0)),
                pl.BlockSpec(w3_bf.shape, lambda b, j: (0, 0)),
                pl.BlockSpec(b3.shape, lambda b, j: (0, 0)),
            ],
            out_specs=pl.BlockSpec((1, out_nc, tile), lambda b, j: (b, 0, j)),
        ),
        compiler_params=pltpu.CompilerParams(
            dimension_semantics=("parallel", "parallel"),
            vmem_limit_bytes=32 * 1024 * 1024),
        cost_estimate=pl.CostEstimate(
            flops=flops,
            transcendentals=transcendentals,
            bytes_accessed=bytes_accessed),
    )(x_flat, w1_bf, b1, w2_bf, b2, w3_bf, b3)

    if pad:
        # Only the (rare) non-128-aligned case pays for a slice; padded lanes
        # hold softplus(b3)+1e-6 garbage and are dropped here.
        out = out[:, :, :n_pix]
    return out.reshape(B, out_nc, H, W)


def init_params(key, in_nc=2, out_nc=8, channel=64):
    """Deterministic synthetic parameters, nn.Conv2d-like fan-in scaling.

    Weights are stored in the native PyTorch Conv2d layout (C_out, C_in);
    biases as (C_out, 1) columns (broadcast over the pixel/lane dim).
    """
    k1, k2, k3, k4, k5, k6 = jax.random.split(key, 6)

    def uni(k, shape, fan_in):
        bound = 1.0 / jnp.sqrt(fan_in)
        return jax.random.uniform(k, shape, jnp.float32, -bound, bound)

    w1 = uni(k1, (channel, in_nc), in_nc)
    b1 = uni(k2, (channel, 1), in_nc)
    w2 = uni(k3, (channel, channel), channel)
    b2 = uni(k4, (channel, 1), channel)
    w3 = uni(k5, (out_nc, channel), channel)
    b3 = uni(k6, (out_nc, 1), channel)
    return (w1, b1, w2, b2, w3, b3)


def hypanet_reference(x_nchw, params, *, bf16_matmul=False):
    """Pure-JAX reference. bf16_matmul mirrors the kernel's MXU precision."""
    w1, b1, w2, b2, w3, b3 = params
    B, C, H, W = x_nchw.shape
    x = x_nchw.reshape(B, C, H * W)

    def mm(w, h):
        if bf16_matmul:
            w = w.astype(jnp.bfloat16)
            h = h.astype(jnp.bfloat16)
        return jnp.einsum("oc,bcn->bon", w, h,
                          preferred_element_type=jnp.float32)

    h = jnp.maximum(mm(w1, x) + b1, 0.0)
    h = jnp.maximum(mm(w2, h) + b2, 0.0)
    h = jax.nn.softplus(mm(w3, h) + b3) + 1e-6
    return h.reshape(B, -1, H, W)


if __name__ == "__main__":
    key = jax.random.PRNGKey(0)
    pkey, xkey = jax.random.split(key)

    in_nc, out_nc, channel = 2, 8, 64
    B, H, W = 2, 16, 16

    params = init_params(pkey, in_nc=in_nc, out_nc=out_nc, channel=channel)
    x = jax.random.normal(xkey, (B, in_nc, H, W), dtype=jnp.float32)

    out = jax.block_until_ready(hypanet_forward(x, params))
    assert out.shape == (B, out_nc, H, W), out.shape
    assert bool(jnp.all(jnp.isfinite(out)))

    # Tight check against a reference with matching bf16 MXU operands.
    ref_bf16 = hypanet_reference(x, params, bf16_matmul=True)
    err_bf16 = float(jnp.max(jnp.abs(out - ref_bf16)))
    assert jnp.allclose(out, ref_bf16, atol=1e-4, rtol=1e-4), err_bf16

    # Looser sanity check against the pure-f32 reference (bf16 operand
    # rounding is the only difference).
    ref_f32 = hypanet_reference(x, params, bf16_matmul=False)
    err_f32 = float(jnp.max(jnp.abs(out - ref_f32)))
    assert jnp.allclose(out, ref_f32, atol=5e-2, rtol=5e-2), err_f32

    print("KERNEL_OK")
</pallas_src>

<mosaic_0001>
module attributes {stable_mosaic.version = 11 : i64} {
  func.func @hypanet_kernel(%arg0: i32, %arg1: i32, %arg2: memref<1x2x256xf32, #tpu.memory_space<vmem>>, %arg3: memref<64x2xbf16, #tpu.memory_space<vmem>>, %arg4: memref<64x1xf32, #tpu.memory_space<vmem>>, %arg5: memref<64x64xbf16, #tpu.memory_space<vmem>>, %arg6: memref<64x1xf32, #tpu.memory_space<vmem>>, %arg7: memref<8x64xbf16, #tpu.memory_space<vmem>>, %arg8: memref<8x1xf32, #tpu.memory_space<vmem>>, %arg9: memref<1x8x256xf32, #tpu.memory_space<vmem>>) attributes {dimension_semantics = [#tpu.dimension_semantics<parallel>, #tpu.dimension_semantics<parallel>], iteration_bounds = array<i64: 2, 1>, scalar_prefetch = 0 : i64, scratch_operands = 0 : i64, tpu.core_type = #tpu.core_type<tc>, window_params = [{transform_indices = @transform_0, window_bounds = array<i64: 1, 2, 256>}, {pipeline_mode = #tpu.pipeline_mode<synchronous>, transform_indices = @transform_1, window_bounds = array<i64: 64, 2>}, {pipeline_mode = #tpu.pipeline_mode<synchronous>, transform_indices = @transform_2, window_bounds = array<i64: 64, 1>}, {pipeline_mode = #tpu.pipeline_mode<synchronous>, transform_indices = @transform_3, window_bounds = array<i64: 64, 64>}, {pipeline_mode = #tpu.pipeline_mode<synchronous>, transform_indices = @transform_4, window_bounds = array<i64: 64, 1>}, {pipeline_mode = #tpu.pipeline_mode<synchronous>, transform_indices = @transform_5, window_bounds = array<i64: 8, 64>}, {pipeline_mode = #tpu.pipeline_mode<synchronous>, transform_indices = @transform_6, window_bounds = array<i64: 8, 1>}, {transform_indices = @transform_7, window_bounds = array<i64: 1, 8, 256>}]} {
    %c0 = arith.constant 0 : index
    %c0_0 = arith.constant 0 : index
    %c0_1 = arith.constant 0 : index
    %0 = vector.load %arg2[%c0, %c0_0, %c0_1] : memref<1x2x256xf32, #tpu.memory_space<vmem>>, vector<1x2x256xf32>
    %1 = vector.shape_cast %0 : vector<1x2x256xf32> to vector<2x256xf32>
    %2 = arith.truncf %1 : vector<2x256xf32> to vector<2x256xbf16>
    %c0_2 = arith.constant 0 : index
    %c0_3 = arith.constant 0 : index
    %3 = vector.load %arg3[%c0_2, %c0_3] : memref<64x2xbf16, #tpu.memory_space<vmem>>, vector<64x2xbf16>
    %cst = arith.constant dense<0.000000e+00> : vector<64x256xf32>
    %4 = tpu.matmul %3, %2, %cst {dimension_numbers = #tpu.dot_dimension_numbers<[1], [0], [0], [1], [0, 0, 1, 1], [], []>} : vector<64x2xbf16>, vector<2x256xbf16>, vector<64x256xf32> -> vector<64x256xf32>
    %c0_4 = arith.constant 0 : index
    %c0_5 = arith.constant 0 : index
    %5 = vector.load %arg4[%c0_4, %c0_5] : memref<64x1xf32, #tpu.memory_space<vmem>>, vector<64x1xf32>
    %6 = vector.broadcast %5 : vector<64x1xf32> to vector<64x256xf32>
    %7 = arith.addf %4, %6 : vector<64x256xf32>
    %cst_6 = arith.constant 0.000000e+00 : f32
    %8 = vector.broadcast %cst_6 : f32 to vector<64x256xf32>
    %9 = arith.maximumf %7, %8 : vector<64x256xf32>
    %10 = arith.truncf %9 : vector<64x256xf32> to vector<64x256xbf16>
    %c0_7 = arith.constant 0 : index
    %c0_8 = arith.constant 0 : index
    %11 = vector.load %arg5[%c0_7, %c0_8] : memref<64x64xbf16, #tpu.memory_space<vmem>>, vector<64x64xbf16>
    %cst_9 = arith.constant dense<0.000000e+00> : vector<64x256xf32>
    %12 = tpu.matmul %11, %10, %cst_9 {dimension_numbers = #tpu.dot_dimension_numbers<[1], [0], [0], [1], [0, 0, 1, 1], [], []>} : vector<64x64xbf16>, vector<64x256xbf16>, vector<64x256xf32> -> vector<64x256xf32>
    %c0_10 = arith.constant 0 : index
    %c0_11 = arith.constant 0 : index
    %13 = vector.load %arg6[%c0_10, %c0_11] : memref<64x1xf32, #tpu.memory_space<vmem>>, vector<64x1xf32>
    %14 = vector.broadcast %13 : vector<64x1xf32> to vector<64x256xf32>
    %15 = arith.addf %12, %14 : vector<64x256xf32>
    %cst_12 = arith.constant 0.000000e+00 : f32
    %16 = vector.broadcast %cst_12 : f32 to vector<64x256xf32>
    %17 = arith.maximumf %15, %16 : vector<64x256xf32>
    %18 = arith.truncf %17 : vector<64x256xf32> to vector<64x256xbf16>
    %c0_13 = arith.constant 0 : index
    %c0_14 = arith.constant 0 : index
    %19 = vector.load %arg7[%c0_13, %c0_14] : memref<8x64xbf16, #tpu.memory_space<vmem>>, vector<8x64xbf16>
    %cst_15 = arith.constant dense<0.000000e+00> : vector<8x256xf32>
    %20 = tpu.matmul %19, %18, %cst_15 {dimension_numbers = #tpu.dot_dimension_numbers<[1], [0], [0], [1], [0, 0, 1, 1], [], []>} : vector<8x64xbf16>, vector<64x256xbf16>, vector<8x256xf32> -> vector<8x256xf32>
    %c0_16 = arith.constant 0 : index
    %c0_17 = arith.constant 0 : index
    %21 = vector.load %arg8[%c0_16, %c0_17] : memref<8x1xf32, #tpu.memory_space<vmem>>, vector<8x1xf32>
    %22 = vector.broadcast %21 : vector<8x1xf32> to vector<8x256xf32>
    %23 = arith.addf %20, %22 : vector<8x256xf32>
    %cst_18 = arith.constant 0.000000e+00 : f32
    %24 = vector.broadcast %cst_18 : f32 to vector<8x256xf32>
    %25 = arith.maximumf %23, %24 : vector<8x256xf32>
    %26 = math.absf %23 : vector<8x256xf32>
    %cst_19 = arith.constant 0.000000e+00 : f32
    %27 = vector.broadcast %cst_19 : f32 to vector<8x256xf32>
    %28 = arith.subf %27, %26 : vector<8x256xf32>
    %29 = math.exp %28 : vector<8x256xf32>
    %30 = math.log1p %29 : vector<8x256xf32>
    %31 = arith.addf %25, %30 : vector<8x256xf32>
    %cst_20 = arith.constant 9.99999997E-7 : f32
    %32 = vector.broadcast %cst_20 : f32 to vector<8x256xf32>
    %33 = arith.addf %31, %32 : vector<8x256xf32>
    %c0_21 = arith.constant 0 : index
    %c0_22 = arith.constant 0 : index
    %c0_23 = arith.constant 0 : index
    %34 = vector.load %arg9[%c0_21, %c0_22, %c0_23] : memref<1x8x256xf32, #tpu.memory_space<vmem>>, vector<1x8x256xf32>
    %35 = vector.shape_cast %34 : vector<1x8x256xf32> to vector<8x256xf32>
    %36 = vector.shape_cast %33 : vector<8x256xf32> to vector<1x8x256xf32>
    tpu.vector_store %arg9[%c0_21, %c0_22, %c0_23], %36 {strides = array<i32>} : memref<1x8x256xf32, #tpu.memory_space<vmem>>, vector<1x8x256xf32>,
    return
  }
  func.func @transform_0(%arg0: i32, %arg1: i32) -> (i32, i32, i32) {
    %c0_i32 = arith.constant 0 : i32
    %c0_i32_0 = arith.constant 0 : i32
    return %arg0, %c0_i32, %arg1 : i32, i32, i32
  }
  func.func @transform_1(%arg0: i32, %arg1: i32) -> (i32, i32) {
    %c0_i32 = arith.constant 0 : i32
    %c0_i32_0 = arith.constant 0 : i32
    %c0_i32_1 = arith.constant 0 : i32
    return %c0_i32, %c0_i32_0 : i32, i32
  }
  func.func @transform_2(%arg0: i32, %arg1: i32) -> (i32, i32) {
    %c0_i32 = arith.constant 0 : i32
    %c0_i32_0 = arith.constant 0 : i32
    %c0_i32_1 = arith.constant 0 : i32
    return %c0_i32, %c0_i32_0 : i32, i32
  }
  func.func @transform_3(%arg0: i32, %arg1: i32) -> (i32, i32) {
    %c0_i32 = arith.constant 0 : i32
    %c0_i32_0 = arith.constant 0 : i32
    %c0_i32_1 = arith.constant 0 : i32
    return %c0_i32, %c0_i32_0 : i32, i32
  }
  func.func @transform_4(%arg0: i32, %arg1: i32) -> (i32, i32) {
    %c0_i32 = arith.constant 0 : i32
    %c0_i32_0 = arith.constant 0 : i32
    %c0_i32_1 = arith.constant 0 : i32
    return %c0_i32, %c0_i32_0 : i32, i32
  }
  func.func @transform_5(%arg0: i32, %arg1: i32) -> (i32, i32) {
    %c0_i32 = arith.constant 0 : i32
    %c0_i32_0 = arith.constant 0 : i32
    %c0_i32_1 = arith.constant 0 : i32
    return %c0_i32, %c0_i32_0 : i32, i32
  }
  func.func @transform_6(%arg0: i32, %arg1: i32) -> (i32, i32) {
    %c0_i32 = arith.constant 0 : i32
    %c0_i32_0 = arith.constant 0 : i32
    %c0_i32_1 = arith.constant 0 : i32
    return %c0_i32, %c0_i32_0 : i32, i32
  }
  func.func @transform_7(%arg0: i32, %arg1: i32) -> (i32, i32, i32) {
    %c0_i32 = arith.constant 0 : i32
    %c0_i32_0 = arith.constant 0 : i32
    return %arg0, %c0_i32, %arg1 : i32, i32, i32
  }
}

</mosaic_0001>

<llo_original>
// kernel: tpu_custom_call.1
$region0: #{tpu_custom_call.1}
  #allocation0 [shape = 'u32[]', space=smem, size = 0x4, offset = 0x4, fixed_abs, tag = 'smem constant byte address 0x4 - core index']
  #allocation1 [shape = 'u32[144,128]{1,0:T(1,128)}', space=vmem, size = 0x12000, scoped, tag = 'internal scratch']
  %s0 = inlined_call_operand.vmem [shape: f32[2,2,256], index: 0, kind: input, shape index: {}]
  %s1 = inlined_call_operand.vmem [shape: bf16[64,2], index: 1, kind: input, shape index: {}]
  %s2 = inlined_call_operand.vmem [shape: f32[64,1], index: 2, kind: input, shape index: {}]
  %s3 = inlined_call_operand.vmem [shape: bf16[64,64], index: 3, kind: input, shape index: {}]
  %s4 = inlined_call_operand.vmem [shape: f32[64,1], index: 4, kind: input, shape index: {}]
  %s5 = inlined_call_operand.vmem [shape: bf16[8,64], index: 5, kind: input, shape index: {}]
  %s6 = inlined_call_operand.vmem [shape: f32[8,1], index: 6, kind: input, shape index: {}]
  %s7 = inlined_call_operand.hbm [shape: f32[2,8,256], index: 7, kind: output, shape index: {}]
  %s8 = sld [smem:[#allocation0]]
  $region61: #{tpu_custom_call.1} parent=0
    _
  %s10 = ssub.s32 1, %s8
  %s11 = scalar_select 0, %s10, %s8
  $region1: #{tpu_custom_call.1} parent=0
    #allocation2 [shape = 'u8[16384]{0}', space=vmem, size = 0x4000, scoped, tag = 'output window, operand 0']
    #allocation3 [shape = 's32[2]{0}', space=sflag, size = 0x8, scoped, tag = 'scoped memory for tpu_custom_call.1']
    %12 = vsyncpa [#allocation3], 0
    %s13 = scalar_lea.sflag [#allocation3], 1
    %14 = vsyncpa %s13, 0
    loop: start=0, step=1, limit=4
    $region2: #{tpu_custom_call.1} parent=1 // loop_pre_header
      _
    $region3: #{tpu_custom_call.1} parent=1 // loop_header
      %s16 = sphi 0, %s20
      %p17 = scmp.ge.s32.totalorder %s16, 4
      %s23 = sphi 0, %s35
      %s24 = sphi 0, %s31
      %s25 = sphi 0, %s23
      %s26 = sphi 0, %s24
      %s27 = sphi 0, %s25
      %s28 = sphi 0, %s26
      %s40 = sphi 0, %s42
      %s43 = sphi 0, %s40
      %s44 = sphi 0, %s43
      %s60 = sphi 0, %s44
      %s64 = sphi 0, %s64
      %s66 = sphi 0, %s64
      %s67 = sphi 0, %s66
      %s81 = sphi 0, %s67
      %s85 = sphi 0, %s85
      %s87 = sphi 0, %s85
      %s88 = sphi 0, %s87
      %s102 = sphi 0, %s88
      %s106 = sphi 0, %s106
      %s108 = sphi 0, %s106
      %s109 = sphi 0, %s108
      %s123 = sphi 0, %s109
      %s127 = sphi 0, %s127
      %s129 = sphi 0, %s127
      %s130 = sphi 0, %s129
      %s144 = sphi 0, %s130
      %s148 = sphi 0, %s148
      %s150 = sphi 0, %s148
      %s151 = sphi 0, %s150
      %s165 = sphi 0, %s151
      %s169 = sphi 0, %s169
      %s171 = sphi 0, %s169
      %s172 = sphi 0, %s171
      %s186 = sphi 0, %s172
      %s194 = sphi 0, %s196
      %s197 = sphi 0, %s194
      %s198 = sphi 0, %s197
      %s214 = sphi 0, %s198
    $region4: #{tpu_custom_call.1} parent=1 // loop_header_branch
      %19 = sbr.rel (%p17) target = $region8
    $region5: #{tpu_custom_call.1} parent=1 // loop_body
      %s21 = ssub.s32 %s16, 1
      %s22 = ssub.s32 %s16, 2
      %s29 = sadd.s32 1, %s24
      %p30 = scmp.ge.s32.totalorder %s29, 1
      %s31 = scalar_select %p30, 0, %s29
      %s32 = sadd.s32 1, %s23
      %s33 = scalar_select %p30, %s32, %s23
      %p34 = scmp.ge.s32.totalorder %s33, 2
      %s35 = scalar_select %p34, 0, %s33
      %s36 = ssub.s32 %s23, %s35
      %s37 = ssub.s32 %s24, %s31
      %s38 = sor.u32 %s36, %s37
      %p39 = scmp.eq.s32.totalorder %s38, 0
      %s41 = sadd.s32 %s40, 1
      %s42 = scalar_select %p39, %s40, %s41
      %p45 = pneg %p39
      %p46 = scmp.eq.s32.totalorder %s16, 1
      %p47 = por %p45, %p46
      %p48 = scmp.ne.s32.totalorder %s40, %s43
      %p49 = scmp.eq.s32.totalorder %s16, 0
      %p50 = por %p48, %p49
      %p51 = scmp.ne.s32.totalorder %s40, %s43
      %p52 = scmp.eq.s32.totalorder %s21, 1
      %p53 = por %p51, %p52
      %p54 = scmp.ne.s32.totalorder %s43, %s44
      %p55 = scmp.eq.s32.totalorder %s21, 0
      %p56 = por %p54, %p55
      %p57 = scmp.ne.s32.totalorder %s43, %s44
      %p58 = scmp.eq.s32.totalorder %s22, 1
      %p59 = por %p57, %p58
      %p61 = scmp.ne.s32.totalorder %s44, %s60
      %p62 = scmp.eq.s32.totalorder %s22, 0
      %p63 = por %p61, %p62
      %s65 = sadd.s32 %s64, 1
      %p68 = scmp.eq.s32.totalorder %s16, 1
      %p69 = scmp.ne.s32.totalorder %s64, %s66
      %p70 = scmp.eq.s32.totalorder %s16, 0
      %p71 = por %p69, %p70
      %p72 = scmp.ne.s32.totalorder %s64, %s66
      %p73 = scmp.eq.s32.totalorder %s21, 1
      %p74 = por %p72, %p73
      %p75 = scmp.ne.s32.totalorder %s66, %s67
      %p76 = scmp.eq.s32.totalorder %s21, 0
      %p77 = por %p75, %p76
      %p78 = scmp.ne.s32.totalorder %s66, %s67
      %p79 = scmp.eq.s32.totalorder %s22, 1
      %p80 = por %p78, %p79
      %p82 = scmp.ne.s32.totalorder %s67, %s81
      %p83 = scmp.eq.s32.totalorder %s22, 0
      %p84 = por %p82, %p83
      %s86 = sadd.s32 %s85, 1
      %p89 = scmp.eq.s32.totalorder %s16, 1
      %p90 = scmp.ne.s32.totalorder %s85, %s87
      %p91 = scmp.eq.s32.totalorder %s16, 0
      %p92 = por %p90, %p91
      %p93 = scmp.ne.s32.totalorder %s85, %s87
      %p94 = scmp.eq.s32.totalorder %s21, 1
      %p95 = por %p93, %p94
      %p96 = scmp.ne.s32.totalorder %s87, %s88
      %p97 = scmp.eq.s32.totalorder %s21, 0
      %p98 = por %p96, %p97
      %p99 = scmp.ne.s32.totalorder %s87, %s88
      %p100 = scmp.eq.s32.totalorder %s22, 1
      %p101 = por %p99, %p100
      %p103 = scmp.ne.s32.totalorder %s88, %s102
      %p104 = scmp.eq.s32.totalorder %s22, 0
      %p105 = por %p103, %p104
      %s107 = sadd.s32 %s106, 1
      %p110 = scmp.eq.s32.totalorder %s16, 1
      %p111 = scmp.ne.s32.totalorder %s106, %s108
      %p112 = scmp.eq.s32.totalorder %s16, 0
      %p113 = por %p111, %p112
      %p114 = scmp.ne.s32.totalorder %s106, %s108
      %p115 = scmp.eq.s32.totalorder %s21, 1
      %p116 = por %p114, %p115
      %p117 = scmp.ne.s32.totalorder %s108, %s109
      %p118 = scmp.eq.s32.totalorder %s21, 0
      %p119 = por %p117, %p118
      %p120 = scmp.ne.s32.totalorder %s108, %s109
      %p121 = scmp.eq.s32.totalorder %s22, 1
      %p122 = por %p120, %p121
      %p124 = scmp.ne.s32.totalorder %s109, %s123
      %p125 = scmp.eq.s32.totalorder %s22, 0
      %p126 = por %p124, %p125
      %s128 = sadd.s32 %s127, 1
      %p131 = scmp.eq.s32.totalorder %s16, 1
      %p132 = scmp.ne.s32.totalorder %s127, %s129
      %p133 = scmp.eq.s32.totalorder %s16, 0
      %p134 = por %p132, %p133
      %p135 = scmp.ne.s32.totalorder %s127, %s129
      %p136 = scmp.eq.s32.totalorder %s21, 1
      %p137 = por %p135, %p136
      %p138 = scmp.ne.s32.totalorder %s129, %s130
      %p139 = scmp.eq.s32.totalorder %s21, 0
      %p140 = por %p138, %p139
      %p141 = scmp.ne.s32.totalorder %s129, %s130
      %p142 = scmp.eq.s32.totalorder %s22, 1
      %p143 = por %p141, %p142
      %p145 = scmp.ne.s32.totalorder %s130, %s144
      %p146 = scmp.eq.s32.totalorder %s22, 0
      %p147 = por %p145, %p146
      %s149 = sadd.s32 %s148, 1
      %p152 = scmp.eq.s32.totalorder %s16, 1
      %p153 = scmp.ne.s32.totalorder %s148, %s150
      %p154 = scmp.eq.s32.totalorder %s16, 0
      %p155 = por %p153, %p154
      %p156 = scmp.ne.s32.totalorder %s148, %s150
      %p157 = scmp.eq.s32.totalorder %s21, 1
      %p158 = por %p156, %p157
      %p159 = scmp.ne.s32.totalorder %s150, %s151
      %p160 = scmp.eq.s32.totalorder %s21, 0
      %p161 = por %p159, %p160
      %p162 = scmp.ne.s32.totalorder %s150, %s151
      %p163 = scmp.eq.s32.totalorder %s22, 1
      %p164 = por %p162, %p163
      %p166 = scmp.ne.s32.totalorder %s151, %s165
      %p167 = scmp.eq.s32.totalorder %s22, 0
      %p168 = por %p166, %p167
      %s170 = sadd.s32 %s169, 1
      %p173 = scmp.eq.s32.totalorder %s16, 1
      %p174 = scmp.ne.s32.totalorder %s169, %s171
      %p175 = scmp.eq.s32.totalorder %s16, 0
      %p176 = por %p174, %p175
      %p177 = scmp.ne.s32.totalorder %s169, %s171
      %p178 = scmp.eq.s32.totalorder %s21, 1
      %p179 = por %p177, %p178
      %p180 = scmp.ne.s32.totalorder %s171, %s172
      %p181 = scmp.eq.s32.totalorder %s21, 0
      %p182 = por %p180, %p181
      %p183 = scmp.ne.s32.totalorder %s171, %s172
      %p184 = scmp.eq.s32.totalorder %s22, 1
      %p185 = por %p183, %p184
      %p187 = scmp.ne.s32.totalorder %s172, %s186
      %p188 = scmp.eq.s32.totalorder %s22, 0
      %p189 = por %p187, %p188
      %s190 = ssub.s32 %s23, %s35
      %s191 = ssub.s32 %s24, %s31
      %s192 = sor.u32 %s190, %s191
      %p193 = scmp.eq.s32.totalorder %s192, 0
      %s195 = sadd.s32 %s194, 1
      %s196 = scalar_select %p193, %s194, %s195
      %p199 = pneg %p193
      %p200 = scmp.eq.s32.totalorder %s16, 1
      %p201 = por %p199, %p200
      %p202 = scmp.ne.s32.totalorder %s194, %s197
      %p203 = scmp.eq.s32.totalorder %s16, 0
      %p204 = por %p202, %p203
      %p205 = scmp.ne.s32.totalorder %s194, %s197
      %p206 = scmp.eq.s32.totalorder %s21, 1
      %p207 = por %p205, %p206
      %p208 = scmp.ne.s32.totalorder %s197, %s198
      %p209 = scmp.eq.s32.totalorder %s21, 0
      %p210 = por %p208, %p209
      %p211 = scmp.ne.s32.totalorder %s197, %s198
      %p212 = scmp.eq.s32.totalorder %s22, 1
      %p213 = por %p211, %p212
      %p215 = scmp.ne.s32.totalorder %s198, %s214
      %p216 = scmp.eq.s32.totalorder %s22, 0
      %p217 = por %p215, %p216
      %p218 = scmp.le.s32.totalorder 1, %s16
      %p219 = scmp.lt.s32.totalorder %s16, 3
      %p220 = pnand %p218, %p219
      %p221 = pneg %p220
      // Predicated region
      $region9: #{tpu_custom_call.1} parent=5 // pred_check
        _
      $region10: #{tpu_custom_call.1} parent=5 // pred_check_branch
        %223 = sbr.rel (%p220) target = $region12
      $region11: #{tpu_custom_call.1} parent=5 // pred_region
        %s224 = ssub.s32 %s16, 1
        // Predicated region
        $region13: #{tpu_custom_call.1} parent=11 // pred_check
          %p225 = pneg %p77
        $region14: #{tpu_custom_call.1} parent=11 // pred_check_branch
          %227 = sbr.rel (%p225) target = $region16
        $region15: #{tpu_custom_call.1} parent=11 // pred_region
          _
        $region16: #{tpu_custom_call.1} parent=11 // pred_fallthru
          _
        // Predicated region
        $region17: #{tpu_custom_call.1} parent=11 // pred_check
          %p228 = pneg %p98
        $region18: #{tpu_custom_call.1} parent=11 // pred_check_branch
          %230 = sbr.rel (%p228) target = $region20
        $region19: #{tpu_custom_call.1} parent=11 // pred_region
          _
        $region20: #{tpu_custom_call.1} parent=11 // pred_fallthru
          _
        // Predicated region
        $region21: #{tpu_custom_call.1} parent=11 // pred_check
          %p231 = pneg %p119
        $region22: #{tpu_custom_call.1} parent=11 // pred_check_branch
          %233 = sbr.rel (%p231) target = $region24
        $region23: #{tpu_custom_call.1} parent=11 // pred_region
          _
        $region24: #{tpu_custom_call.1} parent=11 // pred_fallthru
          _
        // Predicated region
        $region25: #{tpu_custom_call.1} parent=11 // pred_check
          %p234 = pneg %p140
        $region26: #{tpu_custom_call.1} parent=11 // pred_check_branch
          %236 = sbr.rel (%p234) target = $region28
        $region27: #{tpu_custom_call.1} parent=11 // pred_region
          _
        $region28: #{tpu_custom_call.1} parent=11 // pred_fallthru
          _
        // Predicated region
        $region29: #{tpu_custom_call.1} parent=11 // pred_check
          %p237 = pneg %p161
        $region30: #{tpu_custom_call.1} parent=11 // pred_check_branch
          %239 = sbr.rel (%p237) target = $region32
        $region31: #{tpu_custom_call.1} parent=11 // pred_region
          _
        $region32: #{tpu_custom_call.1} parent=11 // pred_fallthru
          _
        // Predicated region
        $region33: #{tpu_custom_call.1} parent=11 // pred_check
          %p240 = pneg %p182
        $region34: #{tpu_custom_call.1} parent=11 // pred_check_branch
          %242 = sbr.rel (%p240) target = $region36
        $region35: #{tpu_custom_call.1} parent=11 // pred_region
          _
        $region36: #{tpu_custom_call.1} parent=11 // pred_fallthru
          _
      $region12: #{tpu_custom_call.1} parent=5 // pred_fallthru
        _
      %p243 = scmp.lt.s32.totalorder %s16, 2
      // Predicated region
      $region37: #{tpu_custom_call.1} parent=5 // pred_check
        %p244 = pneg %p243
      $region38: #{tpu_custom_call.1} parent=5 // pred_check_branch
        %246 = sbr.rel (%p244) target = $region40
      $region39: #{tpu_custom_call.1} parent=5 // pred_region
        // Predicated region
        $region41: #{tpu_custom_call.1} parent=39 // pred_check
          %p247 = pneg %p50
        $region42: #{tpu_custom_call.1} parent=39 // pred_check_branch
          %249 = sbr.rel (%p247) target = $region44
        $region43: #{tpu_custom_call.1} parent=39 // pred_region
          %s250 = smul.u32 2, %s24
          %p251 = scmp.lt.s32.totalorder %s23, 1
          %s252 = scalar_select %p251, %s23, 1
          %p253 = scmp.lt.s32.totalorder %s250, 1
          %s254 = scalar_select %p253, %s250, 1
          %s255 = smul.addr %s252, 2
          %s256 = sadd.s32 %s254, %s255
          %s257 = smul.addr %s256, 2
          %s258 = scalar_lea.vmem %s0, %s257
          %s259 = smul.u32 2, %s24
        $region44: #{tpu_custom_call.1} parent=39 // pred_fallthru
          _
      $region40: #{tpu_custom_call.1} parent=5 // pred_fallthru
        _
      %p260 = scmp.le.s32.totalorder 1, %s16
      %p261 = scmp.lt.s32.totalorder %s16, 3
      %p262 = pnand %p260, %p261
      %p263 = pneg %p262
      // Predicated region
      $region45: #{tpu_custom_call.1} parent=5 // pred_check
        _
      $region46: #{tpu_custom_call.1} parent=5 // pred_check_branch
        %265 = sbr.rel (%p262) target = $region48
      $region47: #{tpu_custom_call.1} parent=5 // pred_region
        %s266 = ssub.s32 %s16, 1
        %s267 = smul.u32 2, %s26
        %p268 = scmp.lt.s32.totalorder %s25, 1
        %s269 = scalar_select %p268, %s25, 1
        %p270 = scmp.lt.s32.totalorder %s267, 1
        %s271 = scalar_select %p270, %s267, 1
        %s272 = smul.addr %s269, 2
        %s273 = sadd.s32 %s271, %s272
        %s274 = smul.addr %s273, 2
        %s275 = scalar_lea.vmem %s0, %s274
        %p276 = pneg %p56
        %p277 = pneg %p53
        %p278 = pneg %p77
        %p279 = pneg %p74
        %p280 = pneg %p98
        %p281 = pneg %p95
        %p282 = pneg %p119
        %p283 = pneg %p116
        %p284 = pneg %p140
        %p285 = pneg %p137
        %p286 = pneg %p161
        %p287 = pneg %p158
        %p288 = pneg %p182
        %p289 = pneg %p179
        %p290 = pneg %p210
        %p291 = pneg %p207
        %s292 = sand.u32 %s197, 1
        %s293 = scalar_lea.sflag [#allocation3], %s292
        %s294 = sand.u32 %s197, 1
        %s295 = smul.addr %s294, 16
        %s296 = scalar_lea.vmem [#allocation2], %s295
        %s297 = smul.u32 2, %s26
        %p298 = scmp.lt.s32.totalorder %s25, 1
        %s299 = scalar_select %p298, %s25, 1
        %p300 = scmp.lt.s32.totalorder %s297, 1
        %s301 = scalar_select %p300, %s297, 1
        %s302 = smul.addr %s299, 2
        %s303 = sadd.s32 %s301, %s302
        %s304 = smul.addr %s303, 2
        %s305 = scalar_lea.vmem %s0, %s304
        %s306 = smul.u32 2, %s26
        %s307 = smul.u32 2, %s26
        %v309 = vld [vmem:[%s305] sm:$0xf]
        %v312 = vunpack.c.l.s4 1983009808
        %v313 = vunpack.c.0.s8 %v312
        %v314 = vlaneseq
        %v315 = vshrl.u32 %v314, 7
        %v316 = vsub.s32 %v313, %v315
        %v317 = vrot.slane %v309, %v316
        %v318 = vcombine.high %v317, %v317
        %v321 = vpack.c.bf16 %v317, %v317
        %v322 = vpack.c.bf16 %v318, %v318
        %v323 = vld [vmem:[%s1] sm:$0xf]
        %v324 = vld [vmem:[%s1 + $0x4] sm:$0xf]
        %v325 = vld [vmem:[%s1 + $0x8] sm:$0xf]
        %v326 = vld [vmem:[%s1 + $0xc] sm:$0xf]
        %v327 = vld [vmem:[%s1 + $0x10] sm:$0xf]
        %v328 = vld [vmem:[%s1 + $0x14] sm:$0xf]
        %v329 = vld [vmem:[%s1 + $0x18] sm:$0xf]
        %v330 = vld [vmem:[%s1 + $0x1c] sm:$0xf]
        %v331 = vld [vmem:[%s2] sm:$0xff]
        %v332 = vld [vmem:[%s2 + $0x8] sm:$0xff]
        %v333 = vld [vmem:[%s2 + $0x10] sm:$0xff]
        %v334 = vld [vmem:[%s2 + $0x18] sm:$0xff]
        %v335 = vld [vmem:[%s2 + $0x20] sm:$0xff]
        %v336 = vld [vmem:[%s2 + $0x28] sm:$0xff]
        %v337 = vld [vmem:[%s2 + $0x30] sm:$0xff]
        %v338 = vld [vmem:[%s2 + $0x38] sm:$0xff]
        %340 = vset.pattern.permute.xlu0 0
        %341 = vperm.xlu0 %340, %v331
        %v342 = vpop.permute.xlu0 %341
        %345 = vset.pattern.permute.xlu0 0
        %346 = vperm.xlu0 %345, %v332
        %v347 = vpop.permute.xlu0 %346
        %350 = vset.pattern.permute.xlu0 0
        %351 = vperm.xlu0 %350, %v333
        %v352 = vpop.permute.xlu0 %351
        %355 = vset.pattern.permute.xlu0 0
        %356 = vperm.xlu0 %355, %v334
        %v357 = vpop.permute.xlu0 %356
        %360 = vset.pattern.permute.xlu0 0
        %361 = vperm.xlu0 %360, %v335
        %v362 = vpop.permute.xlu0 %361
        %365 = vset.pattern.permute.xlu0 0
        %366 = vperm.xlu0 %365, %v336
        %v367 = vpop.permute.xlu0 %366
        %370 = vset.pattern.permute.xlu0 0
        %371 = vperm.xlu0 %370, %v337
        %v372 = vpop.permute.xlu0 %371
        %375 = vset.pattern.permute.xlu0 0
        %376 = vperm.xlu0 %375, %v338
        %v377 = vpop.permute.xlu0 %376
        %v387 = vunpack.c.l.b16 %v323
        %v388 = vunpack.c.l.b16 %v324
        %v389 = vunpack.c.l.b16 %v325
        %v390 = vunpack.c.l.b16 %v326
        %v391 = vunpack.c.l.b16 %v327
        %v392 = vunpack.c.l.b16 %v328
        %v393 = vunpack.c.l.b16 %v329
        %v394 = vunpack.c.l.b16 %v330
        %v395 = vpack.c.b16 %v388, %v387
        %v396 = vpack.c.b16 %v390, %v389
        %v397 = vpack.c.b16 %v392, %v391
        %v398 = vpack.c.b16 %v394, %v393
        %vm399 = vcmask 15360
        %v401 = vsel %vm399, %v395, 0
        %v404 = vsel %vm399, %v396, 0
        %v407 = vsel %vm399, %v397, 0
        %v410 = vsel %vm399, %v398, 0
        %vm412 = vcmask 1040384
        %v414 = vsel %vm412, %v321, 0
        %v417 = vsel %vm412, %v322, 0
        %419 = vmatprep.subr.bf16.mxu0 %v417
        %420 = vmatpush1.bf16.msra.mxu0 %v414
        %421 = vmatprep.subr.bf16.mxu0 0
        %422 = vmatpush1.bf16.msra.mxu0 0
        %423 = vmatprep.subr.bf16.mxu0 0
        %424 = vmatpush1.bf16.msra.mxu0 0
        %425 = vmatprep.subr.bf16.mxu0 0
        %426 = vmatpush1.bf16.msra.mxu0 0
        %427 = vmatprep.subr.bf16.mxu0 0
        %428 = vmatpush1.bf16.msra.mxu0 0
        %429 = vmatprep.subr.bf16.mxu0 0
        %430 = vmatpush1.bf16.msra.mxu0 0
        %431 = vmatprep.subr.bf16.mxu0 0
        %432 = vmatpush1.bf16.msra.mxu0 0
        %433 = vmatprep.subr.bf16.mxu0 0
        %434 = vmatpush1.bf16.msra.mxu0 0
        %435 = vmatprep.subr.bf16.mxu0 0
        %436 = vmatpush1.bf16.msra.mxu0 0
        %437 = vmatprep.subr.bf16.mxu0 0
        %438 = vmatpush1.bf16.msra.mxu0 0
        %439 = vmatprep.subr.bf16.mxu0 0
        %440 = vmatpush1.bf16.msra.mxu0 0
        %441 = vmatprep.subr.bf16.mxu0 0
        %442 = vmatpush1.bf16.msra.mxu0 0
        %443 = vmatprep.subr.bf16.mxu0 0
        %444 = vmatpush1.bf16.msra.mxu0 0
        %445 = vmatprep.subr.bf16.mxu0 0
        %446 = vmatpush1.bf16.msra.mxu0 0
        %447 = vmatprep.subr.bf16.mxu0 0
        %448 = vmatpush1.bf16.msra.mxu0 0
        %449 = vmatprep.subr.bf16.mxu0 0
        %450 = vmatpush1.bf16.msra.mxu0 0
        %451 = vmatprep.mubr.bf16.mxu0 0
        %452 = vmatmul.mubr.bf16.gmra.mrb[0].mxu0 %v401
        %v453 = vpop.f32.mrb[0].mxu0
        %v454 = vadd.f32 %v342, %v453
        %v455 = vpop.f32.mrb[0].mxu0
        %v456 = vadd.f32 %v342, %v455
        %v457 = vpop.f32.mrb[0].mxu0
        %v458 = vadd.f32 %v347, %v457
        %v459 = vpop.f32.mrb[0].mxu0
        %v460 = vadd.f32 %v347, %v459
        %461 = vmatprep.mubr.bf16.mxu0 0
        %462 = vmatmul.mubr.bf16.gmra.mrb[0].mxu0 %v404
        %v463 = vpop.f32.mrb[0].mxu0
        %v464 = vadd.f32 %v352, %v463
        %v465 = vpop.f32.mrb[0].mxu0
        %v466 = vadd.f32 %v352, %v465
        %v467 = vpop.f32.mrb[0].mxu0
        %v468 = vadd.f32 %v357, %v467
        %v469 = vpop.f32.mrb[0].mxu0
        %v470 = vadd.f32 %v357, %v469
        %471 = vmatprep.mubr.bf16.mxu0 0
        %472 = vmatmul.mubr.bf16.gmra.mrb[0].mxu0 %v407
        %v473 = vpop.f32.mrb[0].mxu0
        %v474 = vadd.f32 %v362, %v473
        %v475 = vpop.f32.mrb[0].mxu0
        %v476 = vadd.f32 %v362, %v475
        %v477 = vpop.f32.mrb[0].mxu0
        %v478 = vadd.f32 %v367, %v477
        %v479 = vpop.f32.mrb[0].mxu0
        %v480 = vadd.f32 %v367, %v479
        %481 = vmatprep.mubr.bf16.mxu0 0
        %482 = vmatmul.mubr.bf16.gmra.mrb[0].mxu0 %v410
        %v483 = vpop.f32.mrb[0].mxu0
        %v484 = vadd.f32 %v372, %v483
        %v485 = vpop.f32.mrb[0].mxu0
        %v486 = vadd.f32 %v372, %v485
        %v487 = vpop.f32.mrb[0].mxu0
        %v488 = vadd.f32 %v377, %v487
        %v489 = vpop.f32.mrb[0].mxu0
        %v490 = vadd.f32 %v377, %v489
        %491 = vdwg.mxu0
        %v492 = vmax.f32 %v454, 0.0
        %v493 = vmax.f32 %v456, 0.0
        %v494 = vmax.f32 %v458, 0.0
        %v495 = vmax.f32 %v460, 0.0
        %v496 = vmax.f32 %v464, 0.0
        %v497 = vmax.f32 %v466, 0.0
        %v498 = vmax.f32 %v468, 0.0
        %v499 = vmax.f32 %v470, 0.0
        %v500 = vmax.f32 %v474, 0.0
        %v501 = vmax.f32 %v476, 0.0
        %v502 = vmax.f32 %v478, 0.0
        %v503 = vmax.f32 %v480, 0.0
        %v504 = vmax.f32 %v484, 0.0
        %v505 = vmax.f32 %v486, 0.0
        %v506 = vmax.f32 %v488, 0.0
        %v507 = vmax.f32 %v490, 0.0
        %v508 = vpack.c.bf16 %v494, %v492
        %v509 = vpack.c.bf16 %v495, %v493
        %v510 = vpack.c.bf16 %v498, %v496
        %v511 = vpack.c.bf16 %v499, %v497
        %v512 = vpack.c.bf16 %v502, %v500
        %v513 = vpack.c.bf16 %v503, %v501
        %v514 = vpack.c.bf16 %v506, %v504
        %v515 = vpack.c.bf16 %v507, %v505
        %v516 = vld [vmem:[%s3] sm:$0xf]
        %v517 = vld [vmem:[%s3 + $0x4] sm:$0xf]
        %v518 = vld [vmem:[%s3 + $0x8] sm:$0xf]
        %v519 = vld [vmem:[%s3 + $0xc] sm:$0xf]
        %v520 = vld [vmem:[%s3 + $0x10] sm:$0xf]
        %v521 = vld [vmem:[%s3 + $0x14] sm:$0xf]
        %v522 = vld [vmem:[%s3 + $0x18] sm:$0xf]
        %v523 = vld [vmem:[%s3 + $0x1c] sm:$0xf]
        %v524 = vld [vmem:[%s4] sm:$0xff]
        %v525 = vld [vmem:[%s4 + $0x8] sm:$0xff]
        %v526 = vld [vmem:[%s4 + $0x10] sm:$0xff]
        %v527 = vld [vmem:[%s4 + $0x18] sm:$0xff]
        %v528 = vld [vmem:[%s4 + $0x20] sm:$0xff]
        %v529 = vld [vmem:[%s4 + $0x28] sm:$0xff]
        %v530 = vld [vmem:[%s4 + $0x30] sm:$0xff]
        %v531 = vld [vmem:[%s4 + $0x38] sm:$0xff]
        %533 = vset.pattern.permute.xlu0 0
        %534 = vperm.xlu0 %533, %v524
        %v535 = vpop.permute.xlu0 %534
        %538 = vset.pattern.permute.xlu0 0
        %539 = vperm.xlu0 %538, %v525
        %v540 = vpop.permute.xlu0 %539
        %543 = vset.pattern.permute.xlu0 0
        %544 = vperm.xlu0 %543, %v526
        %v545 = vpop.permute.xlu0 %544
        %548 = vset.pattern.permute.xlu0 0
        %549 = vperm.xlu0 %548, %v527
        %v550 = vpop.permute.xlu0 %549
        %553 = vset.pattern.permute.xlu0 0
        %554 = vperm.xlu0 %553, %v528
        %v555 = vpop.permute.xlu0 %554
        %558 = vset.pattern.permute.xlu0 0
        %559 = vperm.xlu0 %558, %v529
        %v560 = vpop.permute.xlu0 %559
        %563 = vset.pattern.permute.xlu0 0
        %564 = vperm.xlu0 %563, %v530
        %v565 = vpop.permute.xlu0 %564
        %568 = vset.pattern.permute.xlu0 0
        %569 = vperm.xlu0 %568, %v531
        %v570 = vpop.permute.xlu0 %569
        %v580 = vunpack.c.l.b16 %v516
        %v581 = vunpack.c.l.b16 %v517
        %v582 = vunpack.c.l.b16 %v518
        %v583 = vunpack.c.l.b16 %v519
        %v584 = vunpack.c.l.b16 %v520
        %v585 = vunpack.c.l.b16 %v521
        %v586 = vunpack.c.l.b16 %v522
        %v587 = vunpack.c.l.b16 %v523
        %v588 = vpack.c.b16 %v581, %v580
        %v589 = vpack.c.b16 %v583, %v582
        %v590 = vpack.c.b16 %v585, %v584
        %v591 = vpack.c.b16 %v587, %v586
        %vm592 = vcmask 523264
        %v594 = vsel %vm592, %v588, 0
        %v597 = vsel %vm592, %v589, 0
        %v600 = vsel %vm592, %v590, 0
        %v603 = vsel %vm592, %v591, 0
        %605 = vmatprep.subr.bf16.mxu0 %v509
        %606 = vmatpush1.bf16.msra.mxu0 %v508
        %607 = vmatprep.subr.bf16.mxu0 %v511
        %608 = vmatpush1.bf16.msra.mxu0 %v510
        %609 = vmatprep.subr.bf16.mxu0 %v513
        %610 = vmatpush1.bf16.msra.mxu0 %v512
        %611 = vmatprep.subr.bf16.mxu0 %v515
        %612 = vmatpush1.bf16.msra.mxu0 %v514
        %613 = vmatprep.subr.bf16.mxu0 0
        %614 = vmatpush1.bf16.msra.mxu0 0
        %615 = vmatprep.subr.bf16.mxu0 0
        %616 = vmatpush1.bf16.msra.mxu0 0
        %617 = vmatprep.subr.bf16.mxu0 0
        %618 = vmatpush1.bf16.msra.mxu0 0
        %619 = vmatprep.subr.bf16.mxu0 0
        %620 = vmatpush1.bf16.msra.mxu0 0
        %621 = vmatprep.subr.bf16.mxu0 0
        %622 = vmatpush1.bf16.msra.mxu0 0
        %623 = vmatprep.subr.bf16.mxu0 0
        %624 = vmatpush1.bf16.msra.mxu0 0
        %625 = vmatprep.subr.bf16.mxu0 0
        %626 = vmatpush1.bf16.msra.mxu0 0
        %627 = vmatprep.subr.bf16.mxu0 0
        %628 = vmatpush1.bf16.msra.mxu0 0
        %629 = vmatprep.subr.bf16.mxu0 0
        %630 = vmatpush1.bf16.msra.mxu0 0
        %631 = vmatprep.subr.bf16.mxu0 0
        %632 = vmatpush1.bf16.msra.mxu0 0
        %633 = vmatprep.subr.bf16.mxu0 0
        %634 = vmatpush1.bf16.msra.mxu0 0
        %635 = vmatprep.subr.bf16.mxu0 0
        %636 = vmatpush1.bf16.msra.mxu0 0
        %637 = vmatprep.mubr.bf16.mxu0 0
        %638 = vmatmul.mubr.bf16.gmra.mrb[0].mxu0 %v594
        %v639 = vpop.f32.mrb[0].mxu0
        %v640 = vadd.f32 %v535, %v639
        %v641 = vpop.f32.mrb[0].mxu0
        %v642 = vadd.f32 %v535, %v641
        %v643 = vpop.f32.mrb[0].mxu0
        %v644 = vadd.f32 %v540, %v643
        %v645 = vpop.f32.mrb[0].mxu0
        %v646 = vadd.f32 %v540, %v645
        %647 = vmatprep.mubr.bf16.mxu0 0
        %648 = vmatmul.mubr.bf16.gmra.mrb[0].mxu0 %v597
        %v649 = vpop.f32.mrb[0].mxu0
        %v650 = vadd.f32 %v545, %v649
        %v651 = vpop.f32.mrb[0].mxu0
        %v652 = vadd.f32 %v545, %v651
        %v653 = vpop.f32.mrb[0].mxu0
        %v654 = vadd.f32 %v550, %v653
        %v655 = vpop.f32.mrb[0].mxu0
        %v656 = vadd.f32 %v550, %v655
        %657 = vmatprep.mubr.bf16.mxu0 0
        %658 = vmatmul.mubr.bf16.gmra.mrb[0].mxu0 %v600
        %v659 = vpop.f32.mrb[0].mxu0
        %v660 = vadd.f32 %v555, %v659
        %v661 = vpop.f32.mrb[0].mxu0
        %v662 = vadd.f32 %v555, %v661
        %v663 = vpop.f32.mrb[0].mxu0
        %v664 = vadd.f32 %v560, %v663
        %v665 = vpop.f32.mrb[0].mxu0
        %v666 = vadd.f32 %v560, %v665
        %667 = vmatprep.mubr.bf16.mxu0 0
        %668 = vmatmul.mubr.bf16.gmra.mrb[0].mxu0 %v603
        %v669 = vpop.f32.mrb[0].mxu0
        %v670 = vadd.f32 %v565, %v669
        %v671 = vpop.f32.mrb[0].mxu0
        %v672 = vadd.f32 %v565, %v671
        %v673 = vpop.f32.mrb[0].mxu0
        %v674 = vadd.f32 %v570, %v673
        %v675 = vpop.f32.mrb[0].mxu0
        %v676 = vadd.f32 %v570, %v675
        %677 = vdwg.mxu0
        %v678 = vmax.f32 %v640, 0.0
        %v679 = vmax.f32 %v642, 0.0
        %v680 = vmax.f32 %v644, 0.0
        %v681 = vmax.f32 %v646, 0.0
        %v682 = vmax.f32 %v650, 0.0
        %v683 = vmax.f32 %v652, 0.0
        %v684 = vmax.f32 %v654, 0.0
        %v685 = vmax.f32 %v656, 0.0
        %v686 = vmax.f32 %v660, 0.0
        %v687 = vmax.f32 %v662, 0.0
        %v688 = vmax.f32 %v664, 0.0
        %v689 = vmax.f32 %v666, 0.0
        %v690 = vmax.f32 %v670, 0.0
        %v691 = vmax.f32 %v672, 0.0
        %v692 = vmax.f32 %v674, 0.0
        %v693 = vmax.f32 %v676, 0.0
        %v694 = vpack.c.bf16 %v680, %v678
        %v695 = vpack.c.bf16 %v681, %v679
        %v696 = vpack.c.bf16 %v684, %v682
        %v697 = vpack.c.bf16 %v685, %v683
        %v698 = vpack.c.bf16 %v688, %v686
        %v699 = vpack.c.bf16 %v689, %v687
        %v700 = vpack.c.bf16 %v692, %v690
        %v701 = vpack.c.bf16 %v693, %v691
        %v702 = vld [vmem:[%s5] sm:$0xf]
        %v703 = vld [vmem:[%s6] sm:$0xff]
        %705 = vset.pattern.permute.xlu0 0
        %706 = vperm.xlu0 %705, %v703
        %v707 = vpop.permute.xlu0 %706
        %v710 = vsel %vm592, %v702, 0
        %712 = vmatprep.subr.bf16.mxu0 %v695
        %713 = vmatpush1.bf16.msra.mxu0 %v694
        %714 = vmatprep.subr.bf16.mxu0 %v697
        %715 = vmatpush1.bf16.msra.mxu0 %v696
        %716 = vmatprep.subr.bf16.mxu0 %v699
        %717 = vmatpush1.bf16.msra.mxu0 %v698
        %718 = vmatprep.subr.bf16.mxu0 %v701
        %719 = vmatpush1.bf16.msra.mxu0 %v700
        %720 = vmatprep.subr.bf16.mxu0 0
        %721 = vmatpush1.bf16.msra.mxu0 0
        %722 = vmatprep.subr.bf16.mxu0 0
        %723 = vmatpush1.bf16.msra.mxu0 0
        %724 = vmatprep.subr.bf16.mxu0 0
        %725 = vmatpush1.bf16.msra.mxu0 0
        %726 = vmatprep.subr.bf16.mxu0 0
        %727 = vmatpush1.bf16.msra.mxu0 0
        %728 = vmatprep.subr.bf16.mxu0 0
        %729 = vmatpush1.bf16.msra.mxu0 0
        %730 = vmatprep.subr.bf16.mxu0 0
        %731 = vmatpush1.bf16.msra.mxu0 0
        %732 = vmatprep.subr.bf16.mxu0 0
        %733 = vmatpush1.bf16.msra.mxu0 0
        %734 = vmatprep.subr.bf16.mxu0 0
        %735 = vmatpush1.bf16.msra.mxu0 0
        %736 = vmatprep.subr.bf16.mxu0 0
        %737 = vmatpush1.bf16.msra.mxu0 0
        %738 = vmatprep.subr.bf16.mxu0 0
        %739 = vmatpush1.bf16.msra.mxu0 0
        %740 = vmatprep.subr.bf16.mxu0 0
        %741 = vmatpush1.bf16.msra.mxu0 0
        %742 = vmatprep.subr.bf16.mxu0 0
        %743 = vmatpush1.bf16.msra.mxu0 0
        %744 = vmatprep.mubr.bf16.mxu0 0
        %745 = vmatmul.mubr.bf16.gmra.mrb[0].mxu0 %v710
        %v746 = vpop.f32.mrb[0].mxu0
        %v747 = vadd.f32 %v707, %v746
        %v748 = vpop.f32.mrb[0].mxu0
        %v749 = vadd.f32 %v707, %v748
        %v750 = vpop.f32.mrb[0].mxu0
        %v751 = vpop.f32.mrb[0].mxu0
        %752 = vdwg.mxu0
        %v753 = vmax.f32 %v747, 0.0
        %v754 = vmax.f32 %v749, 0.0
        %v755 = vand.u32 2147483647, %v747
        %v756 = vand.u32 2147483647, %v749
        %v757 = vsub.f32 0.0, %v755
        %v758 = vsub.f32 0.0, %v756
        %v759 = vmul.f32 %v757, 1.442695
        %v760 = vpow.pop %v759
        %v761 = vmul.f32 %v758, 1.442695
        %v762 = vpow.pop %v761
        %v763 = vadd.f32 %v760, 1.0
        %v764 = vlog2.pop %v763
        %v765 = vmul.f32 %v764, 0.6931472
        %v766 = vmul.f32 -0.5, %v760
        %v767 = vadd.f32 %v766, 1.0
        %v768 = vmul.f32 %v767, %v760
        %v769 = vand.u32 2147483647, %v760
        %vm770 = vcmp.lt.f32.partialorder %v769, 0.0004427343
        %v771 = vsel %vm770, %v768, %v765
        %v772 = vadd.f32 %v762, 1.0
        %v773 = vlog2.pop %v772
        %v774 = vmul.f32 %v773, 0.6931472
        %v775 = vmul.f32 -0.5, %v762
        %v776 = vadd.f32 %v775, 1.0
        %v777 = vmul.f32 %v776, %v762
        %v778 = vand.u32 2147483647, %v762
        %vm779 = vcmp.lt.f32.partialorder %v778, 0.0004427343
        %v780 = vsel %vm779, %v777, %v774
        %v781 = vadd.f32 %v753, %v771
        %v782 = vadd.f32 %v754, %v780
        %v783 = vadd.f32 %v781, 1e-06
        %v784 = vadd.f32 %v782, 1e-06
        %785 = vst [vmem:[%s296] sm:$0xff] %v783
        %786 = vst [vmem:[%s296 + $0x8] sm:$0xff] %v784
        %s787 = sand.u32 %s197, 1
        %s788 = scalar_lea.sflag [#allocation3], %s787
        %s789 = sand.u32 %s197, 1
        %s790 = smul.addr %s789, 16
        %s791 = scalar_lea.vmem [#allocation2], %s790
        // Predicated region
        $region49: #{tpu_custom_call.1} parent=47 // pred_check
          %p792 = pneg %p207
        $region50: #{tpu_custom_call.1} parent=47 // pred_check_branch
          %794 = sbr.rel (%p792) target = $region52
        $region51: #{tpu_custom_call.1} parent=47 // pred_region
          %s795 = smul.u32 2, %s26
          %s797 = ssub.s32 256, 256
          %798 = vsyncadd %s788, %s797
          %s799 = smul.addr %s25, 2
          %s800 = sadd.s32 %s795, %s799
          %s801 = smul.addr %s800, 128
          %s802 = scalar_lea.hbm %s7, %s801
          %s804 = sshll.u32 %s791, 4
          %s805 = int_to_ptr.vmem [resolvable:$true] %s804
          %807 = dma.vmem_to_hbm [thread:$0]  %s805, 256, %s802, %s788
        $region52: #{tpu_custom_call.1} parent=47 // pred_fallthru
          _
      $region48: #{tpu_custom_call.1} parent=5 // pred_fallthru
        _
      %p808 = scmp.le.s32.totalorder 2, %s16
      // Predicated region
      $region53: #{tpu_custom_call.1} parent=5 // pred_check
        %p809 = pneg %p808
      $region54: #{tpu_custom_call.1} parent=5 // pred_check_branch
        %811 = sbr.rel (%p809) target = $region56
      $region55: #{tpu_custom_call.1} parent=5 // pred_region
        %s812 = ssub.s32 %s16, 2
        // Predicated region
        $region57: #{tpu_custom_call.1} parent=55 // pred_check
          %p813 = pneg %p213
        $region58: #{tpu_custom_call.1} parent=55 // pred_check_branch
          %815 = sbr.rel (%p813) target = $region60
        $region59: #{tpu_custom_call.1} parent=55 // pred_region
          %s816 = sand.u32 %s198, 1
          %s817 = scalar_lea.sflag [#allocation3], %s816
          %s818 = sand.u32 %s198, 1
          %s819 = smul.addr %s818, 16
          %s820 = scalar_lea.vmem [#allocation2], %s819
          %821 = dma.done %s817, 256
        $region60: #{tpu_custom_call.1} parent=55 // pred_fallthru
          _
      $region56: #{tpu_custom_call.1} parent=5 // pred_fallthru
        _
    $region6: #{tpu_custom_call.1} parent=1 // loop_footer
      %s20 = sadd.s32 1, %s16
    $region7: #{tpu_custom_call.1} parent=1 // loop_footer_branch
      %15 = sbr.rel target = $region3
    $region8: #{tpu_custom_call.1} parent=1 // loop_exit
      _
    %822 = vsyncpa [#allocation3], 1
    %s823 = scalar_lea.sflag [#allocation3], 1
    %824 = vsyncpa %s823, 1

</llo_original>
